<compile_context>
chip_gen: v7x
topology: tpu7x:2x2x1
jax: 0.10.0
libtpu: 0.0.40
codegen_flags: <defaults>
</compile_context>

<pallas_src>
import jax
import jax.numpy as jnp
import numpy as np
from jax.experimental import pallas as pl
from jax.experimental.pallas import tpu as pltpu


def glove_loss_kernel(emb_i_ref, emb_j_ref, wij_ref, wf_ref, out_ref):
    """One batch block.
    emb_i_ref/emb_j_ref : (TB, Dp) fused rows [emb | bias | 1]   (VMEM)
    wij_ref/wf_ref      : (TB, 1)  per-row scalars               (VMEM)
    out_ref             : (1, 8, 128) per-block partial sum tile (VMEM)
    """
    prod = emb_i_ref[...] * emb_j_ref[...]                    # VPU elementwise
    # Fused rows encode [emb | bias | 1], so the lane reduction of the product
    # is  score + b_i + b_j  for every row of the block (XLU reduce).
    s = jnp.sum(prod, axis=-1, keepdims=True)                 # (TB, 1)
    diff = s - jnp.log(wij_ref[...])                          # EUP log, vectorized
    nf = diff * diff * wf_ref[...]                            # (TB, 1)
    partial = jnp.sum(nf)                                     # scalar partial per block
    # Lane-dense unmasked store of the replicated partial; wrapper reads [i,0,0].
    out_ref[...] = jnp.full(out_ref.shape, partial, dtype=out_ref.dtype)


def make_fused_tables(w_in, w_out, b_in, b_out):
    """Fuse biases into the embedding tables.  Built ONCE (parameter layout),
    not per forward call, so its HBM cost is amortized."""
    V, D = w_in.shape
    ones = jnp.ones((V, 1), jnp.float32)
    fused_in = jnp.concatenate(
        [w_in.astype(jnp.float32), b_in.astype(jnp.float32), ones], axis=1)
    fused_out = jnp.concatenate(
        [w_out.astype(jnp.float32), ones, b_out.astype(jnp.float32)], axis=1)
    return fused_in, fused_out  # (V, D+2) each


def glove_loss(pos_i, pos_j, wij, wf, fused_in, fused_out, *, tb=128):
    """pos_i/pos_j: [B,1] int; wij/wf: [B,1] f32; fused_*: [V, D+2] f32."""
    B = pos_i.shape[0]
    Dp = fused_in.shape[1]
    nb = (B + tb - 1) // tb
    Bp = nb * tb
    pad = Bp - B

    idx_i = pos_i.reshape(B).astype(jnp.int32)
    idx_j = pos_j.reshape(B).astype(jnp.int32)
    wij_f = wij.reshape(B, 1).astype(jnp.float32)
    wf_f = wf.reshape(B, 1).astype(jnp.float32)

    if pad:
        # Padded rows: valid index 0, wij=1 (log finite), wf=0 (zero contribution).
        idx_i = jnp.pad(idx_i, (0, pad))
        idx_j = jnp.pad(idx_j, (0, pad))
        wij_f = jnp.pad(wij_f, ((0, pad), (0, 0)), constant_values=1.0)
        wf_f = jnp.pad(wf_f, ((0, pad), (0, 0)), constant_values=0.0)

    # Batched row gather -> dense streams the kernel reads at HBM roofline.
    emb_i = jnp.take(fused_in, idx_i, axis=0)   # (Bp, Dp) f32
    emb_j = jnp.take(fused_out, idx_j, axis=0)  # (Bp, Dp) f32

    grid_spec = pltpu.PrefetchScalarGridSpec(
        num_scalar_prefetch=0,
        grid=(nb,),
        in_specs=[
            pl.BlockSpec((tb, Dp), lambda i: (i, 0)),
            pl.BlockSpec((tb, Dp), lambda i: (i, 0)),
            pl.BlockSpec((tb, 1), lambda i: (i, 0)),
            pl.BlockSpec((tb, 1), lambda i: (i, 0)),
        ],
        out_specs=pl.BlockSpec((1, 8, 128), lambda i: (i, 0, 0)),
    )

    partials = pl.pallas_call(
        glove_loss_kernel,
        out_shape=jax.ShapeDtypeStruct((nb, 8, 128), jnp.float32),
        grid_spec=grid_spec,
        compiler_params=pltpu.CompilerParams(
            # Independent per-block partials -> batch-block axis can be split
            # across TensorCores (v7x megacore); no shared accumulator.
            dimension_semantics=("parallel",)),
    )(emb_i, emb_j, wij_f, wf_f)

    # Tiny final reduction over one scalar per batch block.
    return jnp.sum(partials[:, 0, 0])


def glove_loss_ref(pos_i, pos_j, wij, wf, w_in, w_out, b_in, b_out):
    """Pure-JAX reference mirroring the PyTorch forward."""
    idx_i = pos_i[:, 0]
    idx_j = pos_j[:, 0]
    emb_i = jnp.take(w_in, idx_i, axis=0)
    emb_j = jnp.take(w_out, idx_j, axis=0)
    score = jnp.sum(emb_i * emb_j, axis=-1)
    bi = jnp.take(b_in, idx_i, axis=0)[:, 0]
    bj = jnp.take(b_out, idx_j, axis=0)[:, 0]
    nf = jnp.square(score + bi + bj - jnp.log(wij[:, 0]))
    return jnp.sum(nf * wf[:, 0])


if __name__ == "__main__":
    vocab_size = 64
    embed_size = 32
    batch_size = 300   # deliberately not a multiple of the batch tile (tests padding)
    batch_tile = 128

    key = jax.random.PRNGKey(0)
    k_in, k_out, k_bi, k_bj, k_pi, k_pj, k_wij, k_wf = jax.random.split(key, 8)

    # Parameters: Embedding weights uniform(-1, 1) as in the PyTorch __init__.
    w_in = jax.random.uniform(k_in, (vocab_size, embed_size),
                              jnp.float32, minval=-1.0, maxval=1.0)
    w_out = jax.random.uniform(k_out, (vocab_size, embed_size),
                               jnp.float32, minval=-1.0, maxval=1.0)
    # TODO(synk): self.bi / self.bj are used in forward() but never defined in
    # __init__ of the reference module; synthesized here as Embedding(V, 1).
    b_in = jax.random.uniform(k_bi, (vocab_size, 1),
                              jnp.float32, minval=-1.0, maxval=1.0)
    b_out = jax.random.uniform(k_bj, (vocab_size, 1),
                               jnp.float32, minval=-1.0, maxval=1.0)

    # Inputs.
    pos_i = jax.random.randint(k_pi, (batch_size, 1), 0, vocab_size, jnp.int32)
    pos_j = jax.random.randint(k_pj, (batch_size, 1), 0, vocab_size, jnp.int32)
    wij = jax.random.uniform(k_wij, (batch_size, 1),
                             jnp.float32, minval=1.0, maxval=10.0)  # co-occurrence counts > 0
    wf = jax.random.uniform(k_wf, (batch_size, 1),
                            jnp.float32, minval=0.0, maxval=1.0)    # weighting function f(wij)

    # Fused tables built once (parameter layout), outside the per-call path.
    fused_in, fused_out = make_fused_tables(w_in, w_out, b_in, b_out)

    loss = glove_loss(pos_i, pos_j, wij, wf, fused_in, fused_out, tb=batch_tile)
    loss = jax.block_until_ready(loss)

    ref = glove_loss_ref(pos_i, pos_j, wij, wf, w_in, w_out, b_in, b_out)
    ref = jax.block_until_ready(ref)

    np.testing.assert_allclose(np.asarray(loss), np.asarray(ref),
                               rtol=1e-5, atol=1e-4)
    print("KERNEL_OK")
</pallas_src>

<mosaic_0001>
module attributes {stable_mosaic.version = 11 : i64} {
  func.func @glove_loss_kernel(%arg0: i32, %arg1: memref<128x34xf32, #tpu.memory_space<vmem>>, %arg2: memref<128x34xf32, #tpu.memory_space<vmem>>, %arg3: memref<128x1xf32, #tpu.memory_space<vmem>>, %arg4: memref<128x1xf32, #tpu.memory_space<vmem>>, %arg5: memref<1x8x128xf32, #tpu.memory_space<vmem>>) attributes {dimension_semantics = [#tpu.dimension_semantics<parallel>], iteration_bounds = array<i64: 3>, scalar_prefetch = 0 : i64, scratch_operands = 0 : i64, tpu.core_type = #tpu.core_type<tc>, window_params = [{transform_indices = @transform_0, window_bounds = array<i64: 128, 34>}, {transform_indices = @transform_1, window_bounds = array<i64: 128, 34>}, {transform_indices = @transform_2, window_bounds = array<i64: 128, 1>}, {transform_indices = @transform_3, window_bounds = array<i64: 128, 1>}, {transform_indices = @transform_4, window_bounds = array<i64: 1, 8, 128>}]} {
    %c0 = arith.constant 0 : index
    %c0_0 = arith.constant 0 : index
    %0 = vector.load %arg1[%c0, %c0_0] : memref<128x34xf32, #tpu.memory_space<vmem>>, vector<128x34xf32>
    %c0_1 = arith.constant 0 : index
    %c0_2 = arith.constant 0 : index
    %1 = vector.load %arg2[%c0_1, %c0_2] : memref<128x34xf32, #tpu.memory_space<vmem>>, vector<128x34xf32>
    %2 = arith.mulf %0, %1 : vector<128x34xf32>
    %cst = arith.constant dense<0.000000e+00> : vector<128xf32>
    %3 = vector.multi_reduction <add>, %2, %cst [1] : vector<128x34xf32> to vector<128xf32>
    %4 = vector.shape_cast %3 : vector<128xf32> to vector<128x1xf32>
    %c0_3 = arith.constant 0 : index
    %c0_4 = arith.constant 0 : index
    %5 = vector.load %arg3[%c0_3, %c0_4] : memref<128x1xf32, #tpu.memory_space<vmem>>, vector<128x1xf32>
    %6 = math.log %5 : vector<128x1xf32>
    %7 = arith.subf %4, %6 : vector<128x1xf32>
    %8 = arith.mulf %7, %7 : vector<128x1xf32>
    %c0_5 = arith.constant 0 : index
    %c0_6 = arith.constant 0 : index
    %9 = vector.load %arg4[%c0_5, %c0_6] : memref<128x1xf32, #tpu.memory_space<vmem>>, vector<128x1xf32>
    %10 = arith.mulf %8, %9 : vector<128x1xf32>
    %11 = vector.shape_cast %10 : vector<128x1xf32> to vector<1x128x1xf32>
    %cst_7 = arith.constant dense<0.000000e+00> : vector<1xf32>
    %12 = vector.multi_reduction <add>, %11, %cst_7 [1, 2] : vector<1x128x1xf32> to vector<1xf32>
    %13 = vector.shape_cast %12 : vector<1xf32> to vector<1x1x1xf32>
    %14 = vector.extract %13[0, 0, 0] : f32 from vector<1x1x1xf32>
    %15 = vector.broadcast %14 : f32 to vector<1x8x128xf32>
    %c0_8 = arith.constant 0 : index
    %c0_9 = arith.constant 0 : index
    %c0_10 = arith.constant 0 : index
    %16 = vector.load %arg5[%c0_8, %c0_9, %c0_10] : memref<1x8x128xf32, #tpu.memory_space<vmem>>, vector<1x8x128xf32>
    tpu.vector_store %arg5[%c0_8, %c0_9, %c0_10], %15 {strides = array<i32>} : memref<1x8x128xf32, #tpu.memory_space<vmem>>, vector<1x8x128xf32>,
    return
  }
  func.func @transform_0(%arg0: i32) -> (i32, i32) {
    %c0_i32 = arith.constant 0 : i32
    %c0_i32_0 = arith.constant 0 : i32
    return %arg0, %c0_i32 : i32, i32
  }
  func.func @transform_1(%arg0: i32) -> (i32, i32) {
    %c0_i32 = arith.constant 0 : i32
    %c0_i32_0 = arith.constant 0 : i32
    return %arg0, %c0_i32 : i32, i32
  }
  func.func @transform_2(%arg0: i32) -> (i32, i32) {
    %c0_i32 = arith.constant 0 : i32
    %c0_i32_0 = arith.constant 0 : i32
    return %arg0, %c0_i32 : i32, i32
  }
  func.func @transform_3(%arg0: i32) -> (i32, i32) {
    %c0_i32 = arith.constant 0 : i32
    %c0_i32_0 = arith.constant 0 : i32
    return %arg0, %c0_i32 : i32, i32
  }
  func.func @transform_4(%arg0: i32) -> (i32, i32, i32) {
    %c0_i32 = arith.constant 0 : i32
    %c0_i32_0 = arith.constant 0 : i32
    %c0_i32_1 = arith.constant 0 : i32
    return %arg0, %c0_i32, %c0_i32_0 : i32, i32, i32
  }
}

</mosaic_0001>

<llo_original>
// kernel: tpu_custom_call.1
$region0: #{tpu_custom_call.1}
  #allocation0 [shape = 'u32[]', space=smem, size = 0x4, offset = 0x4, fixed_abs, tag = 'smem constant byte address 0x4 - core index']
  #allocation1 [shape = 'u32[144,128]{1,0:T(1,128)}', space=vmem, size = 0x12000, scoped, tag = 'internal scratch']
  %s0 = inlined_call_operand.vmem [shape: f32[384,34], index: 0, kind: input, shape index: {}]
  %s1 = inlined_call_operand.vmem [shape: f32[384,34], index: 1, kind: input, shape index: {}]
  %s2 = inlined_call_operand.vmem [shape: f32[384,1], index: 2, kind: input, shape index: {}]
  %s3 = inlined_call_operand.vmem [shape: f32[384,1], index: 3, kind: input, shape index: {}]
  %s4 = inlined_call_operand.hbm [shape: f32[3,8,128], index: 4, kind: output, shape index: {}]
  %s5 = sld [smem:[#allocation0]]
  $region49: #{tpu_custom_call.1} parent=0
    _
  %s7 = ssub.s32 1, %s5
  %s8 = scalar_select 0, %s7, %s5
  $region1: #{tpu_custom_call.1} parent=0
    #allocation2 [shape = 'u8[8192]{0}', space=vmem, size = 0x2000, scoped, tag = 'output window, operand 0']
    #allocation3 [shape = 's32[2]{0}', space=sflag, size = 0x8, scoped, tag = 'scoped memory for tpu_custom_call.1']
    %9 = vsyncpa [#allocation3], 0
    %s10 = scalar_lea.sflag [#allocation3], 1
    %11 = vsyncpa %s10, 0
    loop: start=0, step=1, limit=5
    $region2: #{tpu_custom_call.1} parent=1 // loop_pre_header
      _
    $region3: #{tpu_custom_call.1} parent=1 // loop_header
      %s13 = sphi 0, %s17
      %p14 = scmp.ge.s32.totalorder %s13, 5
      %s23 = sphi 0, %s25
      %s26 = sphi 0, %s23
      %s27 = sphi 0, %s26
      %s43 = sphi 0, %s27
      %s49 = sphi 0, %s51
      %s52 = sphi 0, %s49
      %s53 = sphi 0, %s52
      %s69 = sphi 0, %s53
      %s75 = sphi 0, %s77
      %s78 = sphi 0, %s75
      %s79 = sphi 0, %s78
      %s95 = sphi 0, %s79
      %s101 = sphi 0, %s103
      %s104 = sphi 0, %s101
      %s105 = sphi 0, %s104
      %s121 = sphi 0, %s105
      %s127 = sphi 0, %s129
      %s130 = sphi 0, %s127
      %s131 = sphi 0, %s130
      %s147 = sphi 0, %s131
    $region4: #{tpu_custom_call.1} parent=1 // loop_header_branch
      %16 = sbr.rel (%p14) target = $region8
    $region5: #{tpu_custom_call.1} parent=1 // loop_body
      %s18 = ssub.s32 %s13, 1
      %s19 = ssub.s32 %s13, 2
      %s20 = sadd.s32 %s13, 1
      %s21 = ssub.s32 %s13, %s20
      %p22 = scmp.eq.s32.totalorder %s21, 0
      %s24 = sadd.s32 %s23, 1
      %s25 = scalar_select %p22, %s23, %s24
      %p28 = pneg %p22
      %p29 = scmp.eq.s32.totalorder %s13, 2
      %p30 = por %p28, %p29
      %p31 = scmp.ne.s32.totalorder %s23, %s26
      %p32 = scmp.eq.s32.totalorder %s13, 0
      %p33 = por %p31, %p32
      %p34 = scmp.ne.s32.totalorder %s23, %s26
      %p35 = scmp.eq.s32.totalorder %s18, 2
      %p36 = por %p34, %p35
      %p37 = scmp.ne.s32.totalorder %s26, %s27
      %p38 = scmp.eq.s32.totalorder %s18, 0
      %p39 = por %p37, %p38
      %p40 = scmp.ne.s32.totalorder %s26, %s27
      %p41 = scmp.eq.s32.totalorder %s19, 2
      %p42 = por %p40, %p41
      %p44 = scmp.ne.s32.totalorder %s27, %s43
      %p45 = scmp.eq.s32.totalorder %s19, 0
      %p46 = por %p44, %p45
      %s47 = ssub.s32 %s13, %s20
      %p48 = scmp.eq.s32.totalorder %s47, 0
      %s50 = sadd.s32 %s49, 1
      %s51 = scalar_select %p48, %s49, %s50
      %p54 = pneg %p48
      %p55 = scmp.eq.s32.totalorder %s13, 2
      %p56 = por %p54, %p55
      %p57 = scmp.ne.s32.totalorder %s49, %s52
      %p58 = scmp.eq.s32.totalorder %s13, 0
      %p59 = por %p57, %p58
      %p60 = scmp.ne.s32.totalorder %s49, %s52
      %p61 = scmp.eq.s32.totalorder %s18, 2
      %p62 = por %p60, %p61
      %p63 = scmp.ne.s32.totalorder %s52, %s53
      %p64 = scmp.eq.s32.totalorder %s18, 0
      %p65 = por %p63, %p64
      %p66 = scmp.ne.s32.totalorder %s52, %s53
      %p67 = scmp.eq.s32.totalorder %s19, 2
      %p68 = por %p66, %p67
      %p70 = scmp.ne.s32.totalorder %s53, %s69
      %p71 = scmp.eq.s32.totalorder %s19, 0
      %p72 = por %p70, %p71
      %s73 = ssub.s32 %s13, %s20
      %p74 = scmp.eq.s32.totalorder %s73, 0
      %s76 = sadd.s32 %s75, 1
      %s77 = scalar_select %p74, %s75, %s76
      %p80 = pneg %p74
      %p81 = scmp.eq.s32.totalorder %s13, 2
      %p82 = por %p80, %p81
      %p83 = scmp.ne.s32.totalorder %s75, %s78
      %p84 = scmp.eq.s32.totalorder %s13, 0
      %p85 = por %p83, %p84
      %p86 = scmp.ne.s32.totalorder %s75, %s78
      %p87 = scmp.eq.s32.totalorder %s18, 2
      %p88 = por %p86, %p87
      %p89 = scmp.ne.s32.totalorder %s78, %s79
      %p90 = scmp.eq.s32.totalorder %s18, 0
      %p91 = por %p89, %p90
      %p92 = scmp.ne.s32.totalorder %s78, %s79
      %p93 = scmp.eq.s32.totalorder %s19, 2
      %p94 = por %p92, %p93
      %p96 = scmp.ne.s32.totalorder %s79, %s95
      %p97 = scmp.eq.s32.totalorder %s19, 0
      %p98 = por %p96, %p97
      %s99 = ssub.s32 %s13, %s20
      %p100 = scmp.eq.s32.totalorder %s99, 0
      %s102 = sadd.s32 %s101, 1
      %s103 = scalar_select %p100, %s101, %s102
      %p106 = pneg %p100
      %p107 = scmp.eq.s32.totalorder %s13, 2
      %p108 = por %p106, %p107
      %p109 = scmp.ne.s32.totalorder %s101, %s104
      %p110 = scmp.eq.s32.totalorder %s13, 0
      %p111 = por %p109, %p110
      %p112 = scmp.ne.s32.totalorder %s101, %s104
      %p113 = scmp.eq.s32.totalorder %s18, 2
      %p114 = por %p112, %p113
      %p115 = scmp.ne.s32.totalorder %s104, %s105
      %p116 = scmp.eq.s32.totalorder %s18, 0
      %p117 = por %p115, %p116
      %p118 = scmp.ne.s32.totalorder %s104, %s105
      %p119 = scmp.eq.s32.totalorder %s19, 2
      %p120 = por %p118, %p119
      %p122 = scmp.ne.s32.totalorder %s105, %s121
      %p123 = scmp.eq.s32.totalorder %s19, 0
      %p124 = por %p122, %p123
      %s125 = ssub.s32 %s13, %s20
      %p126 = scmp.eq.s32.totalorder %s125, 0
      %s128 = sadd.s32 %s127, 1
      %s129 = scalar_select %p126, %s127, %s128
      %p132 = pneg %p126
      %p133 = scmp.eq.s32.totalorder %s13, 2
      %p134 = por %p132, %p133
      %p135 = scmp.ne.s32.totalorder %s127, %s130
      %p136 = scmp.eq.s32.totalorder %s13, 0
      %p137 = por %p135, %p136
      %p138 = scmp.ne.s32.totalorder %s127, %s130
      %p139 = scmp.eq.s32.totalorder %s18, 2
      %p140 = por %p138, %p139
      %p141 = scmp.ne.s32.totalorder %s130, %s131
      %p142 = scmp.eq.s32.totalorder %s18, 0
      %p143 = por %p141, %p142
      %p144 = scmp.ne.s32.totalorder %s130, %s131
      %p145 = scmp.eq.s32.totalorder %s19, 2
      %p146 = por %p144, %p145
      %p148 = scmp.ne.s32.totalorder %s131, %s147
      %p149 = scmp.eq.s32.totalorder %s19, 0
      %p150 = por %p148, %p149
      %p151 = scmp.le.s32.totalorder 1, %s13
      %p152 = scmp.lt.s32.totalorder %s13, 4
      %p153 = pnand %p151, %p152
      %p154 = pneg %p153
      // Predicated region
      $region9: #{tpu_custom_call.1} parent=5 // pred_check
        _
      $region10: #{tpu_custom_call.1} parent=5 // pred_check_branch
        %156 = sbr.rel (%p153) target = $region12
      $region11: #{tpu_custom_call.1} parent=5 // pred_region
        %s157 = ssub.s32 %s13, 1
      $region12: #{tpu_custom_call.1} parent=5 // pred_fallthru
        _
      %p158 = scmp.lt.s32.totalorder %s13, 3
      // Predicated region
      $region13: #{tpu_custom_call.1} parent=5 // pred_check
        %p159 = pneg %p158
      $region14: #{tpu_custom_call.1} parent=5 // pred_check_branch
        %161 = sbr.rel (%p159) target = $region16
      $region15: #{tpu_custom_call.1} parent=5 // pred_region
        // Predicated region
        $region17: #{tpu_custom_call.1} parent=15 // pred_check
          %p162 = pneg %p33
        $region18: #{tpu_custom_call.1} parent=15 // pred_check_branch
          %164 = sbr.rel (%p162) target = $region20
        $region19: #{tpu_custom_call.1} parent=15 // pred_region
          %s165 = smul.u32 16, %s13
          %p166 = scmp.lt.s32.totalorder %s165, 47
          %s167 = scalar_select %p166, %s165, 47
          %s168 = smul.addr %s167, 8
          %s169 = scalar_lea.vmem %s0, %s168
          %s170 = smul.u32 16, %s13
        $region20: #{tpu_custom_call.1} parent=15 // pred_fallthru
          _
        // Predicated region
        $region21: #{tpu_custom_call.1} parent=15 // pred_check
          %p171 = pneg %p59
        $region22: #{tpu_custom_call.1} parent=15 // pred_check_branch
          %173 = sbr.rel (%p171) target = $region24
        $region23: #{tpu_custom_call.1} parent=15 // pred_region
          %s174 = smul.u32 16, %s13
          %p175 = scmp.lt.s32.totalorder %s174, 47
          %s176 = scalar_select %p175, %s174, 47
          %s177 = smul.addr %s176, 8
          %s178 = scalar_lea.vmem %s1, %s177
          %s179 = smul.u32 16, %s13
        $region24: #{tpu_custom_call.1} parent=15 // pred_fallthru
          _
        // Predicated region
        $region25: #{tpu_custom_call.1} parent=15 // pred_check
          %p180 = pneg %p85
        $region26: #{tpu_custom_call.1} parent=15 // pred_check_branch
          %182 = sbr.rel (%p180) target = $region28
        $region27: #{tpu_custom_call.1} parent=15 // pred_region
          %s183 = smul.u32 16, %s13
          %p184 = scmp.lt.s32.totalorder %s183, 47
          %s185 = scalar_select %p184, %s183, 47
          %s186 = smul.addr %s185, 8
          %s187 = scalar_lea.vmem %s2, %s186
          %s188 = smul.u32 16, %s13
        $region28: #{tpu_custom_call.1} parent=15 // pred_fallthru
          _
        // Predicated region
        $region29: #{tpu_custom_call.1} parent=15 // pred_check
          %p189 = pneg %p111
        $region30: #{tpu_custom_call.1} parent=15 // pred_check_branch
          %191 = sbr.rel (%p189) target = $region32
        $region31: #{tpu_custom_call.1} parent=15 // pred_region
          %s192 = smul.u32 16, %s13
          %p193 = scmp.lt.s32.totalorder %s192, 47
          %s194 = scalar_select %p193, %s192, 47
          %s195 = smul.addr %s194, 8
          %s196 = scalar_lea.vmem %s3, %s195
          %s197 = smul.u32 16, %s13
        $region32: #{tpu_custom_call.1} parent=15 // pred_fallthru
          _
      $region16: #{tpu_custom_call.1} parent=5 // pred_fallthru
        _
      %p198 = scmp.le.s32.totalorder 1, %s13
      %p199 = scmp.lt.s32.totalorder %s13, 4
      %p200 = pnand %p198, %p199
      %p201 = pneg %p200
      // Predicated region
      $region33: #{tpu_custom_call.1} parent=5 // pred_check
        _
      $region34: #{tpu_custom_call.1} parent=5 // pred_check_branch
        %203 = sbr.rel (%p200) target = $region36
      $region35: #{tpu_custom_call.1} parent=5 // pred_region
        %s204 = ssub.s32 %s13, 1
        %s205 = smul.u32 16, %s18
        %p206 = scmp.lt.s32.totalorder %s205, 47
        %s207 = scalar_select %p206, %s205, 47
        %s208 = smul.addr %s207, 8
        %s209 = scalar_lea.vmem %s0, %s208
        %p210 = pneg %p39
        %p211 = pneg %p36
        %s212 = smul.u32 16, %s18
        %p213 = scmp.lt.s32.totalorder %s212, 47
        %s214 = scalar_select %p213, %s212, 47
        %s215 = smul.addr %s214, 8
        %s216 = scalar_lea.vmem %s1, %s215
        %p217 = pneg %p65
        %p218 = pneg %p62
        %s219 = smul.u32 16, %s18
        %p220 = scmp.lt.s32.totalorder %s219, 47
        %s221 = scalar_select %p220, %s219, 47
        %s222 = smul.addr %s221, 8
        %s223 = scalar_lea.vmem %s2, %s222
        %p224 = pneg %p91
        %p225 = pneg %p88
        %s226 = smul.u32 16, %s18
        %p227 = scmp.lt.s32.totalorder %s226, 47
        %s228 = scalar_select %p227, %s226, 47
        %s229 = smul.addr %s228, 8
        %s230 = scalar_lea.vmem %s3, %s229
        %p231 = pneg %p117
        %p232 = pneg %p114
        %p233 = pneg %p143
        %p234 = pneg %p140
        %s235 = sand.u32 %s130, 1
        %s236 = scalar_lea.sflag [#allocation3], %s235
        %s237 = sand.u32 %s130, 1
        %s238 = smul.addr %s237, 8
        %s239 = scalar_lea.vmem [#allocation2], %s238
        %s240 = smul.u32 16, %s18
        %p241 = scmp.lt.s32.totalorder %s240, 47
        %s242 = scalar_select %p241, %s240, 47
        %s243 = smul.addr %s242, 8
        %s244 = scalar_lea.vmem %s0, %s243
        %s245 = smul.u32 16, %s18
        %s246 = smul.u32 16, %s18
        %p247 = scmp.lt.s32.totalorder %s246, 47
        %s248 = scalar_select %p247, %s246, 47
        %s249 = smul.addr %s248, 8
        %s250 = scalar_lea.vmem %s1, %s249
        %s251 = smul.u32 16, %s18
        %s252 = smul.u32 16, %s18
        %p253 = scmp.lt.s32.totalorder %s252, 47
        %s254 = scalar_select %p253, %s252, 47
        %s255 = smul.addr %s254, 8
        %s256 = scalar_lea.vmem %s2, %s255
        %s257 = smul.u32 16, %s18
        %s258 = smul.u32 16, %s18
        %p259 = scmp.lt.s32.totalorder %s258, 47
        %s260 = scalar_select %p259, %s258, 47
        %s261 = smul.addr %s260, 8
        %s262 = scalar_lea.vmem %s3, %s261
        %s263 = smul.u32 16, %s18
        %v264 = vld [vmem:[%s244] sm:$0xff]
        %v265 = vld [vmem:[%s244 + $0x8] sm:$0xff]
        %v266 = vld [vmem:[%s244 + $0x10] sm:$0xff]
        %v267 = vld [vmem:[%s244 + $0x18] sm:$0xff]
        %v268 = vld [vmem:[%s244 + $0x20] sm:$0xff]
        %v269 = vld [vmem:[%s244 + $0x28] sm:$0xff]
        %v270 = vld [vmem:[%s244 + $0x30] sm:$0xff]
        %v271 = vld [vmem:[%s244 + $0x38] sm:$0xff]
        %v272 = vld [vmem:[%s244 + $0x40] sm:$0xff]
        %v273 = vld [vmem:[%s244 + $0x48] sm:$0xff]
        %v274 = vld [vmem:[%s244 + $0x50] sm:$0xff]
        %v275 = vld [vmem:[%s244 + $0x58] sm:$0xff]
        %v276 = vld [vmem:[%s244 + $0x60] sm:$0xff]
        %v277 = vld [vmem:[%s244 + $0x68] sm:$0xff]
        %v278 = vld [vmem:[%s244 + $0x70] sm:$0xff]
        %v279 = vld [vmem:[%s244 + $0x78] sm:$0xff]
        %v280 = vld [vmem:[%s250] sm:$0xff]
        %v281 = vld [vmem:[%s250 + $0x8] sm:$0xff]
        %v282 = vld [vmem:[%s250 + $0x10] sm:$0xff]
        %v283 = vld [vmem:[%s250 + $0x18] sm:$0xff]
        %v284 = vld [vmem:[%s250 + $0x20] sm:$0xff]
        %v285 = vld [vmem:[%s250 + $0x28] sm:$0xff]
        %v286 = vld [vmem:[%s250 + $0x30] sm:$0xff]
        %v287 = vld [vmem:[%s250 + $0x38] sm:$0xff]
        %v288 = vld [vmem:[%s250 + $0x40] sm:$0xff]
        %v289 = vld [vmem:[%s250 + $0x48] sm:$0xff]
        %v290 = vld [vmem:[%s250 + $0x50] sm:$0xff]
        %v291 = vld [vmem:[%s250 + $0x58] sm:$0xff]
        %v292 = vld [vmem:[%s250 + $0x60] sm:$0xff]
        %v293 = vld [vmem:[%s250 + $0x68] sm:$0xff]
        %v294 = vld [vmem:[%s250 + $0x70] sm:$0xff]
        %v295 = vld [vmem:[%s250 + $0x78] sm:$0xff]
        %v296 = vmul.f32 %v264, %v280
        %v297 = vmul.f32 %v265, %v281
        %v298 = vmul.f32 %v266, %v282
        %v299 = vmul.f32 %v267, %v283
        %v300 = vmul.f32 %v268, %v284
        %v301 = vmul.f32 %v269, %v285
        %v302 = vmul.f32 %v270, %v286
        %v303 = vmul.f32 %v271, %v287
        %v304 = vmul.f32 %v272, %v288
        %v305 = vmul.f32 %v273, %v289
        %v306 = vmul.f32 %v274, %v290
        %v307 = vmul.f32 %v275, %v291
        %v308 = vmul.f32 %v276, %v292
        %v309 = vmul.f32 %v277, %v293
        %v310 = vmul.f32 %v278, %v294
        %v311 = vmul.f32 %v279, %v295
        %vm312 = vcmask 277504
        %v313 = vsel %vm312, %v296, 0.0
        %314 = vadd.xlane.f32.xlu0 %v313
        %v315 = vpop.xlane.xlu0 %314
        %v316 = vsel %vm312, %v297, 0.0
        %317 = vadd.xlane.f32.xlu0 %v316
        %v318 = vpop.xlane.xlu0 %317
        %v319 = vsel %vm312, %v298, 0.0
        %320 = vadd.xlane.f32.xlu0 %v319
        %v321 = vpop.xlane.xlu0 %320
        %v322 = vsel %vm312, %v299, 0.0
        %323 = vadd.xlane.f32.xlu0 %v322
        %v324 = vpop.xlane.xlu0 %323
        %v325 = vsel %vm312, %v300, 0.0
        %326 = vadd.xlane.f32.xlu0 %v325
        %v327 = vpop.xlane.xlu0 %326
        %v328 = vsel %vm312, %v301, 0.0
        %329 = vadd.xlane.f32.xlu0 %v328
        %v330 = vpop.xlane.xlu0 %329
        %v331 = vsel %vm312, %v302, 0.0
        %332 = vadd.xlane.f32.xlu0 %v331
        %v333 = vpop.xlane.xlu0 %332
        %v334 = vsel %vm312, %v303, 0.0
        %335 = vadd.xlane.f32.xlu0 %v334
        %v336 = vpop.xlane.xlu0 %335
        %v337 = vsel %vm312, %v304, 0.0
        %338 = vadd.xlane.f32.xlu0 %v337
        %v339 = vpop.xlane.xlu0 %338
        %v340 = vsel %vm312, %v305, 0.0
        %341 = vadd.xlane.f32.xlu0 %v340
        %v342 = vpop.xlane.xlu0 %341
        %v343 = vsel %vm312, %v306, 0.0
        %344 = vadd.xlane.f32.xlu0 %v343
        %v345 = vpop.xlane.xlu0 %344
        %v346 = vsel %vm312, %v307, 0.0
        %347 = vadd.xlane.f32.xlu0 %v346
        %v348 = vpop.xlane.xlu0 %347
        %v349 = vsel %vm312, %v308, 0.0
        %350 = vadd.xlane.f32.xlu0 %v349
        %v351 = vpop.xlane.xlu0 %350
        %v352 = vsel %vm312, %v309, 0.0
        %353 = vadd.xlane.f32.xlu0 %v352
        %v354 = vpop.xlane.xlu0 %353
        %v355 = vsel %vm312, %v310, 0.0
        %356 = vadd.xlane.f32.xlu0 %v355
        %v357 = vpop.xlane.xlu0 %356
        %v358 = vsel %vm312, %v311, 0.0
        %359 = vadd.xlane.f32.xlu0 %v358
        %v360 = vpop.xlane.xlu0 %359
        %v361 = vld [vmem:[%s256] sm:$0xff]
        %v362 = vld [vmem:[%s256 + $0x8] sm:$0xff]
        %v363 = vld [vmem:[%s256 + $0x10] sm:$0xff]
        %v364 = vld [vmem:[%s256 + $0x18] sm:$0xff]
        %v365 = vld [vmem:[%s256 + $0x20] sm:$0xff]
        %v366 = vld [vmem:[%s256 + $0x28] sm:$0xff]
        %v367 = vld [vmem:[%s256 + $0x30] sm:$0xff]
        %v368 = vld [vmem:[%s256 + $0x38] sm:$0xff]
        %v369 = vld [vmem:[%s256 + $0x40] sm:$0xff]
        %v370 = vld [vmem:[%s256 + $0x48] sm:$0xff]
        %v371 = vld [vmem:[%s256 + $0x50] sm:$0xff]
        %v372 = vld [vmem:[%s256 + $0x58] sm:$0xff]
        %v373 = vld [vmem:[%s256 + $0x60] sm:$0xff]
        %v374 = vld [vmem:[%s256 + $0x68] sm:$0xff]
        %v375 = vld [vmem:[%s256 + $0x70] sm:$0xff]
        %v376 = vld [vmem:[%s256 + $0x78] sm:$0xff]
        %v377 = vlog2.pop %v361
        %v378 = vmul.f32 %v377, 0.6931472
        %v379 = vlog2.pop %v362
        %v380 = vmul.f32 %v379, 0.6931472
        %v381 = vlog2.pop %v363
        %v382 = vmul.f32 %v381, 0.6931472
        %v383 = vlog2.pop %v364
        %v384 = vmul.f32 %v383, 0.6931472
        %v385 = vlog2.pop %v365
        %v386 = vmul.f32 %v385, 0.6931472
        %v387 = vlog2.pop %v366
        %v388 = vmul.f32 %v387, 0.6931472
        %v389 = vlog2.pop %v367
        %v390 = vmul.f32 %v389, 0.6931472
        %v391 = vlog2.pop %v368
        %v392 = vmul.f32 %v391, 0.6931472
        %v393 = vlog2.pop %v369
        %v394 = vmul.f32 %v393, 0.6931472
        %v395 = vlog2.pop %v370
        %v396 = vmul.f32 %v395, 0.6931472
        %v397 = vlog2.pop %v371
        %v398 = vmul.f32 %v397, 0.6931472
        %v399 = vlog2.pop %v372
        %v400 = vmul.f32 %v399, 0.6931472
        %v401 = vlog2.pop %v373
        %v402 = vmul.f32 %v401, 0.6931472
        %v403 = vlog2.pop %v374
        %v404 = vmul.f32 %v403, 0.6931472
        %v405 = vlog2.pop %v375
        %v406 = vmul.f32 %v405, 0.6931472
        %v407 = vlog2.pop %v376
        %v408 = vmul.f32 %v407, 0.6931472
        %v409 = vsub.f32 %v315, %v378
        %v410 = vsub.f32 %v318, %v380
        %v411 = vsub.f32 %v321, %v382
        %v412 = vsub.f32 %v324, %v384
        %v413 = vsub.f32 %v327, %v386
        %v414 = vsub.f32 %v330, %v388
        %v415 = vsub.f32 %v333, %v390
        %v416 = vsub.f32 %v336, %v392
        %v417 = vsub.f32 %v339, %v394
        %v418 = vsub.f32 %v342, %v396
        %v419 = vsub.f32 %v345, %v398
        %v420 = vsub.f32 %v348, %v400
        %v421 = vsub.f32 %v351, %v402
        %v422 = vsub.f32 %v354, %v404
        %v423 = vsub.f32 %v357, %v406
        %v424 = vsub.f32 %v360, %v408
        %v425 = vmul.f32 %v409, %v409
        %v426 = vmul.f32 %v410, %v410
        %v427 = vmul.f32 %v411, %v411
        %v428 = vmul.f32 %v412, %v412
        %v429 = vmul.f32 %v413, %v413
        %v430 = vmul.f32 %v414, %v414
        %v431 = vmul.f32 %v415, %v415
        %v432 = vmul.f32 %v416, %v416
        %v433 = vmul.f32 %v417, %v417
        %v434 = vmul.f32 %v418, %v418
        %v435 = vmul.f32 %v419, %v419
        %v436 = vmul.f32 %v420, %v420
        %v437 = vmul.f32 %v421, %v421
        %v438 = vmul.f32 %v422, %v422
        %v439 = vmul.f32 %v423, %v423
        %v440 = vmul.f32 %v424, %v424
        %v441 = vld [vmem:[%s262] sm:$0xff]
        %v442 = vld [vmem:[%s262 + $0x8] sm:$0xff]
        %v443 = vld [vmem:[%s262 + $0x10] sm:$0xff]
        %v444 = vld [vmem:[%s262 + $0x18] sm:$0xff]
        %v445 = vld [vmem:[%s262 + $0x20] sm:$0xff]
        %v446 = vld [vmem:[%s262 + $0x28] sm:$0xff]
        %v447 = vld [vmem:[%s262 + $0x30] sm:$0xff]
        %v448 = vld [vmem:[%s262 + $0x38] sm:$0xff]
        %v449 = vld [vmem:[%s262 + $0x40] sm:$0xff]
        %v450 = vld [vmem:[%s262 + $0x48] sm:$0xff]
        %v451 = vld [vmem:[%s262 + $0x50] sm:$0xff]
        %v452 = vld [vmem:[%s262 + $0x58] sm:$0xff]
        %v453 = vld [vmem:[%s262 + $0x60] sm:$0xff]
        %v454 = vld [vmem:[%s262 + $0x68] sm:$0xff]
        %v455 = vld [vmem:[%s262 + $0x70] sm:$0xff]
        %v456 = vld [vmem:[%s262 + $0x78] sm:$0xff]
        %v457 = vmul.f32 %v425, %v441
        %v458 = vmul.f32 %v426, %v442
        %v459 = vmul.f32 %v427, %v443
        %v460 = vmul.f32 %v428, %v444
        %v461 = vmul.f32 %v429, %v445
        %v462 = vmul.f32 %v430, %v446
        %v463 = vmul.f32 %v431, %v447
        %v464 = vmul.f32 %v432, %v448
        %v465 = vmul.f32 %v433, %v449
        %v466 = vmul.f32 %v434, %v450
        %v467 = vmul.f32 %v435, %v451
        %v468 = vmul.f32 %v436, %v452
        %v469 = vmul.f32 %v437, %v453
        %v470 = vmul.f32 %v438, %v454
        %v471 = vmul.f32 %v439, %v455
        %v472 = vmul.f32 %v440, %v456
        %vm473 = vcmask 7168
        %v474 = vsel %vm473, %v457, 0.0
        %v475 = vsel %vm473, %v458, 0.0
        %v476 = vadd.f32 %v474, %v475
        %v477 = vsel %vm473, %v459, 0.0
        %v478 = vadd.f32 %v476, %v477
        %v479 = vsel %vm473, %v460, 0.0
        %v480 = vadd.f32 %v478, %v479
        %v481 = vsel %vm473, %v461, 0.0
        %v482 = vadd.f32 %v480, %v481
        %v483 = vsel %vm473, %v462, 0.0
        %v484 = vadd.f32 %v482, %v483
        %v485 = vsel %vm473, %v463, 0.0
        %v486 = vadd.f32 %v484, %v485
        %v487 = vsel %vm473, %v464, 0.0
        %v488 = vadd.f32 %v486, %v487
        %v489 = vsel %vm473, %v465, 0.0
        %v490 = vadd.f32 %v488, %v489
        %v491 = vsel %vm473, %v466, 0.0
        %v492 = vadd.f32 %v490, %v491
        %v493 = vsel %vm473, %v467, 0.0
        %v494 = vadd.f32 %v492, %v493
        %v495 = vsel %vm473, %v468, 0.0
        %v496 = vadd.f32 %v494, %v495
        %v497 = vsel %vm473, %v469, 0.0
        %v498 = vadd.f32 %v496, %v497
        %v499 = vsel %vm473, %v470, 0.0
        %v500 = vadd.f32 %v498, %v499
        %v501 = vsel %vm473, %v471, 0.0
        %v502 = vadd.f32 %v500, %v501
        %v503 = vsel %vm473, %v472, 0.0
        %v504 = vadd.f32 %v502, %v503
        %505 = vadd.xlane.f32.xlu0 %v504
        %v506 = vpop.xlane.xlu0 %505
        %v507 = vrot.slane %v506, 4
        %v508 = vadd.f32 %v506, %v507
        %v509 = vrot.slane %v508, 2
        %v510 = vadd.f32 %v508, %v509
        %v511 = vrot.slane %v510, 1
        %v512 = vadd.f32 %v510, %v511
        %s513 = vtos %v512
        %v514 = vstv %s513
        %515 = vst [vmem:[%s239] sm:$0xff] %v514
        %s516 = sand.u32 %s130, 1
        %s517 = scalar_lea.sflag [#allocation3], %s516
        %s518 = sand.u32 %s130, 1
        %s519 = smul.addr %s518, 8
        %s520 = scalar_lea.vmem [#allocation2], %s519
        // Predicated region
        $region37: #{tpu_custom_call.1} parent=35 // pred_check
          %p521 = pneg %p140
        $region38: #{tpu_custom_call.1} parent=35 // pred_check_branch
          %523 = sbr.rel (%p521) target = $region40
        $region39: #{tpu_custom_call.1} parent=35 // pred_region
          %s525 = ssub.s32 128, 128
          %526 = vsyncadd %s517, %s525
          %s527 = smul.addr %s18, 128
          %s528 = scalar_lea.hbm %s4, %s527
          %s530 = sshll.u32 %s520, 4
          %s531 = int_to_ptr.vmem [resolvable:$true] %s530
          %533 = dma.vmem_to_hbm [thread:$0]  %s531, 128, %s528, %s517
        $region40: #{tpu_custom_call.1} parent=35 // pred_fallthru
          _
      $region36: #{tpu_custom_call.1} parent=5 // pred_fallthru
        _
      %p534 = scmp.le.s32.totalorder 2, %s13
      // Predicated region
      $region41: #{tpu_custom_call.1} parent=5 // pred_check
        %p535 = pneg %p534
      $region42: #{tpu_custom_call.1} parent=5 // pred_check_branch
        %537 = sbr.rel (%p535) target = $region44
      $region43: #{tpu_custom_call.1} parent=5 // pred_region
        %s538 = ssub.s32 %s13, 2
        // Predicated region
        $region45: #{tpu_custom_call.1} parent=43 // pred_check
          %p539 = pneg %p146
        $region46: #{tpu_custom_call.1} parent=43 // pred_check_branch
          %541 = sbr.rel (%p539) target = $region48
        $region47: #{tpu_custom_call.1} parent=43 // pred_region
          %s542 = sand.u32 %s131, 1
          %s543 = scalar_lea.sflag [#allocation3], %s542
          %s544 = sand.u32 %s131, 1
          %s545 = smul.addr %s544, 8
          %s546 = scalar_lea.vmem [#allocation2], %s545
          %547 = dma.done %s543, 128
        $region48: #{tpu_custom_call.1} parent=43 // pred_fallthru
          _
      $region44: #{tpu_custom_call.1} parent=5 // pred_fallthru
        _
    $region6: #{tpu_custom_call.1} parent=1 // loop_footer
      %s17 = sadd.s32 1, %s13
    $region7: #{tpu_custom_call.1} parent=1 // loop_footer_branch
      %12 = sbr.rel target = $region3
    $region8: #{tpu_custom_call.1} parent=1 // loop_exit
      _
    %548 = vsyncpa [#allocation3], 1
    %s549 = scalar_lea.sflag [#allocation3], 1
    %550 = vsyncpa %s549, 1

</llo_original>
